<compile_context>
chip_gen: v6e
topology: v6e:2x2x1
jax: 0.10.0
libtpu: 0.0.40
codegen_flags: <defaults>
</compile_context>

<pallas_src>
import jax
import jax.numpy as jnp
from jax.experimental import pallas as pl
from jax.experimental.pallas import tpu as pltpu


def _round_up(n: int, m: int) -> int:
    return ((n + m - 1) // m) * m


def _linear_kernel(x_ref, w_ref, b_ref, o_ref):
    # x_ref: (2, TB)  VMEM  — feature-major batch tile
    # w_ref: (2,)     SMEM  — [W[0,0], W[0,1]]  (PyTorch weight row, flattened)
    # b_ref: (1,)     SMEM
    # o_ref: (1, TB)  VMEM
    w0 = w_ref[0]
    w1 = w_ref[1]
    b = b_ref[0]
    # Full sublane rows (no width-1 lane slices); f32 accumulation.
    x0 = x_ref[0:1, :].astype(jnp.float32)   # (1, TB)
    x1 = x_ref[1:2, :].astype(jnp.float32)   # (1, TB)
    out = w0 * x0 + w1 * x1 + b              # VPU broadcast MAC
    o_ref[...] = out.astype(o_ref.dtype)


def netn1_forward(x, weight, bias, *, tb: int = 512):
    """x: (B, 2), weight: (1, 2) (PyTorch nn.Linear layout), bias: (1,)."""
    B, in_features = x.shape
    out_features = weight.shape[0]
    assert in_features == 2 and out_features == 1

    # Scalars for SMEM: always f32 (v5e has no bf16 VPU path; cost is zero).
    w_flat = weight.reshape(-1).astype(jnp.float32)  # (2,)
    b_flat = bias.reshape(-1).astype(jnp.float32)    # (1,)

    # Pick a lane-dense tile: multiple of 128, no larger than needed for B.
    tb = min(tb, _round_up(B, 128))
    tb = _round_up(tb, 128)
    B_pad = _round_up(B, tb)
    grid = (B_pad // tb,)

    # Feature-major layout: (B, 2) -> (2, B_pad), zero-padded along batch.
    x_fm = jnp.transpose(x)                                   # (2, B)
    if B_pad != B:
        x_fm = jnp.pad(x_fm, ((0, 0), (0, B_pad - B)))        # (2, B_pad)

    out_fm = pl.pallas_call(
        _linear_kernel,
        out_shape=jax.ShapeDtypeStruct((1, B_pad), x.dtype),
        grid=grid,
        in_specs=[
            pl.BlockSpec((2, tb), lambda i: (0, i)),                 # x tile (VMEM)
            pl.BlockSpec(memory_space=pltpu.MemorySpace.SMEM),       # weight (2,)
            pl.BlockSpec(memory_space=pltpu.MemorySpace.SMEM),       # bias (1,)
        ],
        out_specs=pl.BlockSpec((1, tb), lambda i: (0, i)),
        compiler_params=pltpu.CompilerParams(
            dimension_semantics=("parallel",),
        ),
    )(x_fm, w_flat, b_flat)

    # Back to PyTorch layout: (1, B_pad) -> (B, 1).
    return jnp.transpose(out_fm[:, :B])


if __name__ == "__main__":
    key = jax.random.PRNGKey(0)
    k_x, k_w, k_b, k_x2 = jax.random.split(key, 4)

    B, IN, OUT = 8, 2, 1

    # Deterministic parameter init matching nn.Linear(2, 1) default:
    # U(-1/sqrt(in_features), 1/sqrt(in_features))
    bound = 1.0 / jnp.sqrt(jnp.float32(IN))
    weight = jax.random.uniform(k_w, (OUT, IN), jnp.float32, -bound, bound)
    bias = jax.random.uniform(k_b, (OUT,), jnp.float32, -bound, bound)

    # Small batch (the module's intended regime).
    x = jax.random.normal(k_x, (B, IN), jnp.float32)
    out = jax.block_until_ready(netn1_forward(x, weight, bias))
    ref = x @ weight.T + bias
    assert out.shape == (B, OUT)
    assert jnp.allclose(out, ref, atol=1e-5, rtol=1e-5)

    # Larger, non-tile-aligned batch to exercise the tiled grid + padding path.
    B2 = 1000
    x2 = jax.random.normal(k_x2, (B2, IN), jnp.float32)
    out2 = jax.block_until_ready(netn1_forward(x2, weight, bias))
    ref2 = x2 @ weight.T + bias
    assert out2.shape == (B2, OUT)
    assert jnp.allclose(out2, ref2, atol=1e-5, rtol=1e-5)

    print("KERNEL_OK")
</pallas_src>

<mosaic_0001>
module attributes {stable_mosaic.version = 11 : i64} {
  func.func @_linear_kernel(%arg0: i32, %arg1: memref<2x128xf32, #tpu.memory_space<vmem>>, %arg2: memref<2xf32, #tpu.memory_space<smem>>, %arg3: memref<1xf32, #tpu.memory_space<smem>>, %arg4: memref<1x128xf32, #tpu.memory_space<vmem>>) attributes {dimension_semantics = [#tpu.dimension_semantics<parallel>], iteration_bounds = array<i64: 1>, scalar_prefetch = 0 : i64, scratch_operands = 0 : i64, tpu.core_type = #tpu.core_type<tc>, window_params = [{transform_indices = @transform_0, window_bounds = array<i64: 2, 128>}, {transform_indices = @transform_1, window_bounds = array<i64: 2>}, {transform_indices = @transform_2, window_bounds = array<i64: 1>}, {transform_indices = @transform_3, window_bounds = array<i64: 1, 128>}]} {
    %c0 = arith.constant 0 : index
    %0 = memref.load %arg2[%c0] : memref<2xf32, #tpu.memory_space<smem>>
    %c1 = arith.constant 1 : index
    %1 = memref.load %arg2[%c1] : memref<2xf32, #tpu.memory_space<smem>>
    %c0_0 = arith.constant 0 : index
    %2 = memref.load %arg3[%c0_0] : memref<1xf32, #tpu.memory_space<smem>>
    %c0_1 = arith.constant 0 : index
    %c0_2 = arith.constant 0 : index
    %3 = vector.load %arg1[%c0_1, %c0_2] : memref<2x128xf32, #tpu.memory_space<vmem>>, vector<1x128xf32>
    %c1_3 = arith.constant 1 : index
    %c0_4 = arith.constant 0 : index
    %4 = vector.load %arg1[%c1_3, %c0_4] : memref<2x128xf32, #tpu.memory_space<vmem>>, vector<1x128xf32>
    %5 = vector.broadcast %0 : f32 to vector<1x128xf32>
    %6 = arith.mulf %5, %3 : vector<1x128xf32>
    %7 = vector.broadcast %1 : f32 to vector<1x128xf32>
    %8 = arith.mulf %7, %4 : vector<1x128xf32>
    %9 = arith.addf %6, %8 : vector<1x128xf32>
    %10 = vector.broadcast %2 : f32 to vector<1x128xf32>
    %11 = arith.addf %9, %10 : vector<1x128xf32>
    %c0_5 = arith.constant 0 : index
    %c0_6 = arith.constant 0 : index
    %12 = vector.load %arg4[%c0_5, %c0_6] : memref<1x128xf32, #tpu.memory_space<vmem>>, vector<1x128xf32>
    tpu.vector_store %arg4[%c0_5, %c0_6], %11 {strides = array<i32>} : memref<1x128xf32, #tpu.memory_space<vmem>>, vector<1x128xf32>,
    return
  }
  func.func @transform_0(%arg0: i32) -> (i32, i32) {
    %c0_i32 = arith.constant 0 : i32
    %c0_i32_0 = arith.constant 0 : i32
    return %c0_i32, %arg0 : i32, i32
  }
  func.func @transform_1(%arg0: i32) -> i32 {
    %c0_i32 = arith.constant 0 : i32
    %c0_i32_0 = arith.constant 0 : i32
    return %c0_i32 : i32
  }
  func.func @transform_2(%arg0: i32) -> i32 {
    %c0_i32 = arith.constant 0 : i32
    %c0_i32_0 = arith.constant 0 : i32
    return %c0_i32 : i32
  }
  func.func @transform_3(%arg0: i32) -> (i32, i32) {
    %c0_i32 = arith.constant 0 : i32
    %c0_i32_0 = arith.constant 0 : i32
    return %c0_i32, %arg0 : i32, i32
  }
}

</mosaic_0001>

<llo_original>
// kernel: tpu_custom_call.1
$region0: #{tpu_custom_call.1}
  #allocation0 [shape = 'u32[]', space=smem, size = 0x4, offset = 0x4, fixed_abs, tag = 'smem constant byte address 0x4 - core index']
  #allocation1 [shape = 'u32[144,128]{1,0:T(1,128)}', space=vmem, size = 0x12000, scoped, tag = 'internal scratch']
  #allocation2 [shape = 'f32[1]{0:T(128)S(6)}', space=smem, size = 0x200, scoped, tag = 'scoped memory for tpu_custom_call.1']
  %s0 = inlined_call_operand.vmem [shape: f32[2,128], index: 0, kind: input, shape index: {}]
  %s1 = inlined_call_operand.vmem [shape: f32[2], index: 1, kind: input, shape index: {}]
  %s2 = inlined_call_operand.<no memory space> [shape: f32[1], index: 2, kind: input, shape index: {}]
  %s3 = inlined_call_operand.hbm [shape: f32[1,128], index: 3, kind: output, shape index: {}]
  %s4 = sld [smem:[#allocation0]]
  $region26: #{tpu_custom_call.1} parent=0
    _
  %s6 = ssub.s32 1, %s4
  %s7 = scalar_select 0, %s6, %s4
  %8 = sst [smem:[#allocation2]] %s2
  $region1: #{tpu_custom_call.1} parent=0
    #allocation3 [shape = 'u8[512]{0}', space=smem, size = 0x200, scoped, tag = 'input window, operand 1, single buffered']
    #allocation4 [shape = 's32[1]{0}', space=sflag, size = 0x4, scoped, tag = 'scoped memory for tpu_custom_call.1']
    #allocation5 [shape = 's32[1]{0}', space=sflag, size = 0x4, scoped, tag = 'scoped memory for tpu_custom_call.1']
    #allocation6 [shape = 'u8[512]{0}', space=vmem, size = 0x400, scoped, tag = 'output window, operand 0, single buffered']
    %9 = vsyncpa [#allocation5], 0
    %10 = vsyncpa [#allocation4], 0
    // Predicated region
    $region2: #{tpu_custom_call.1} parent=1 // pred_check
      _
    $region3: #{tpu_custom_call.1} parent=1 // pred_check_branch
      %12 = sbr.rel (0) target = $region5
    $region4: #{tpu_custom_call.1} parent=1 // pred_region
      _
    $region5: #{tpu_custom_call.1} parent=1 // pred_fallthru
      _
    // Predicated region
    $region6: #{tpu_custom_call.1} parent=1 // pred_check
      _
    $region7: #{tpu_custom_call.1} parent=1 // pred_check_branch
      %14 = sbr.rel (0) target = $region9
    $region8: #{tpu_custom_call.1} parent=1 // pred_region
      %s16 = ssub.s32 16, 16
      %17 = vsyncadd [#allocation5], %s16
      %s19 = sshll.u32 %s1, 4
      %s20 = int_to_ptr.vmem [resolvable:$true] %s19
      %22 = dma.vmem_to_smem %s20, 16, [#allocation3], [#allocation5]
    $region9: #{tpu_custom_call.1} parent=1 // pred_fallthru
      _
    // Predicated region
    $region10: #{tpu_custom_call.1} parent=1 // pred_check
      _
    $region11: #{tpu_custom_call.1} parent=1 // pred_check_branch
      %24 = sbr.rel (0) target = $region13
    $region12: #{tpu_custom_call.1} parent=1 // pred_region
      _
    $region13: #{tpu_custom_call.1} parent=1 // pred_fallthru
      _
    // Predicated region
    $region14: #{tpu_custom_call.1} parent=1 // pred_check
      _
    $region15: #{tpu_custom_call.1} parent=1 // pred_check_branch
      %26 = sbr.rel (0) target = $region17
    $region16: #{tpu_custom_call.1} parent=1 // pred_region
      %27 = dma.done [#allocation5], 16
    $region17: #{tpu_custom_call.1} parent=1 // pred_fallthru
      _
    %28 = sfence
    %s29 = sld [smem:[#allocation3]]
    %s30 = sld [smem:[#allocation3 + $0x1]]
    %s31 = sld [smem:[#allocation2]]
    %v32 = vld [vmem:[%s0] sm:$0x1]
    %v33 = vld [vmem:[%s0 + $0x1] sm:$0x1]
    %v34 = vstv %s29
    %v35 = vmul.f32 %v34, %v32
    %v36 = vstv %s30
    %v37 = vmul.f32 %v36, %v33
    %v38 = vadd.f32 %v35, %v37
    %v39 = vstv %s31
    %v40 = vadd.f32 %v38, %v39
    %41 = vst [vmem:[#allocation6] sm:$0x1] %v40
    // Predicated region
    $region18: #{tpu_custom_call.1} parent=1 // pred_check
      _
    $region19: #{tpu_custom_call.1} parent=1 // pred_check_branch
      %43 = sbr.rel (0) target = $region21
    $region20: #{tpu_custom_call.1} parent=1 // pred_region
      %s45 = ssub.s32 16, 16
      %46 = vsyncadd [#allocation4], %s45
      %s48 = sshll.u32 [#allocation6], 4
      %s49 = int_to_ptr.vmem [resolvable:$true] %s48
      %51 = dma.vmem_to_hbm [thread:$0]  %s49, 16, %s3, [#allocation4]
    $region21: #{tpu_custom_call.1} parent=1 // pred_fallthru
      _
    // Predicated region
    $region22: #{tpu_custom_call.1} parent=1 // pred_check
      _
    $region23: #{tpu_custom_call.1} parent=1 // pred_check_branch
      %53 = sbr.rel (0) target = $region25
    $region24: #{tpu_custom_call.1} parent=1 // pred_region
      %54 = dma.done [#allocation4], 16
    $region25: #{tpu_custom_call.1} parent=1 // pred_fallthru
      _
    %55 = vsyncpa [#allocation4], 1
    %56 = vsyncpa [#allocation5], 1

</llo_original>
